<compile_context>
chip_gen: v6e
topology: v6e:2x2x1
jax: 0.10.0
libtpu: 0.0.40
codegen_flags: <defaults>
</compile_context>

<pallas_src>
import functools

import jax
import jax.numpy as jnp
import numpy as np
from jax.experimental import pallas as pl
from jax.experimental.pallas import tpu as pltpu


def _round_up(v, m):
    return ((v + m - 1) // m) * m


def _selmul_kernel(x_ref, w_ref, o_ref, *, input_dim):
    # x_ref: (TB, D)   w_ref: (D*D, Op)   o_ref: (TB, Op)
    xf = x_ref[...].astype(jnp.float32)                       # (TB, D)
    # Build y with y[:, i*D + j] = x[:, i] * x[:, j] via lane concatenation
    # (avoids reshaping the tiled dims; D is small and static).
    pieces = [xf * xf[:, i:i + 1] for i in range(input_dim)]  # D x (TB, D)
    y = jnp.concatenate(pieces, axis=1)                       # (TB, D*D) f32
    # One MXU matmul with K = D*D; bf16 operands if the weight is bf16.
    y = y.astype(w_ref.dtype)
    o_ref[...] = jnp.dot(
        y, w_ref[...], preferred_element_type=jnp.float32
    ).astype(o_ref.dtype)


def _expand_weight(W, input_dim):
    """W: (out_dim, halfway_dim) torch.nn.Linear layout -> (D*D, out_dim)
    zero-padded dense weight matching the upper-tri row-major selection order."""
    out_dim = W.shape[0]
    rows, cols = np.triu_indices(input_dim)          # row-major upper triangle
    W3 = jnp.zeros((input_dim, input_dim, out_dim), W.dtype)
    W3 = W3.at[jnp.asarray(rows), jnp.asarray(cols), :].set(W.T)
    return W3.reshape(input_dim * input_dim, out_dim)


def selmul_forward(x, W, *, input_dim, output_dim, tb=512):
    """Pallas implementation of SelMul.forward (bias=False)."""
    squeeze = x.ndim == 1
    if squeeze:
        x = x[None, :]
    B = x.shape[0]
    assert x.shape[1] == input_dim
    halfway_dim = input_dim * (input_dim + 1) // 2
    assert W.shape == (output_dim, halfway_dim)

    # Dense, lane-padded weight: (D*D, Op) with Op a multiple of 128 so the
    # output stores are unmasked and the MXU N dimension is fully used.
    W2 = _expand_weight(W, input_dim)
    Op = _round_up(max(output_dim, 1), 128)
    if Op != output_dim:
        W2 = jnp.pad(W2, ((0, 0), (0, Op - output_dim)))

    # Batch tile: as large as requested but no bigger than the (8-aligned)
    # batch, so tiny test batches don't pad to 512 rows.
    tb_eff = max(8, min(tb, _round_up(B, 8)))
    Bp = _round_up(B, tb_eff)
    if Bp != B:
        x = jnp.pad(x, ((0, Bp - B), (0, 0)))

    itemsize = jnp.dtype(x.dtype).itemsize
    w_itemsize = jnp.dtype(W2.dtype).itemsize
    kernel = functools.partial(_selmul_kernel, input_dim=input_dim)

    out = pl.pallas_call(
        kernel,
        out_shape=jax.ShapeDtypeStruct((Bp, Op), x.dtype),
        grid_spec=pltpu.PrefetchScalarGridSpec(
            num_scalar_prefetch=0,
            grid=(Bp // tb_eff,),
            in_specs=[
                pl.BlockSpec((tb_eff, input_dim), lambda b: (b, 0)),
                # Constant block index: the weight stays resident across the
                # batch axis (not re-DMA'd per step).
                pl.BlockSpec((input_dim * input_dim, Op), lambda b: (0, 0)),
            ],
            out_specs=pl.BlockSpec((tb_eff, Op), lambda b: (b, 0)),
        ),
        compiler_params=pltpu.CompilerParams(
            dimension_semantics=("parallel",)),
        cost_estimate=pl.CostEstimate(
            flops=2 * Bp * input_dim * input_dim * Op,
            transcendentals=0,
            bytes_accessed=(Bp * input_dim * itemsize
                            + input_dim * input_dim * Op * w_itemsize
                            + Bp * Op * itemsize),
        ),
    )(x, W2)

    out = out[:B, :output_dim]
    if squeeze:
        out = out[0]
    return out


if __name__ == "__main__":
    input_dim = 8
    output_dim = 32
    halfway_dim = input_dim * (input_dim + 1) // 2   # 36

    key = jax.random.PRNGKey(0)
    k_x, k_w = jax.random.split(key)

    # Deterministic example input (batch=2) and Linear weight (bias=False),
    # matching torch.nn.Linear(halfway_dim, output_dim) weight shape.
    x = jax.random.normal(k_x, (2, input_dim), dtype=jnp.float32)
    bound = 1.0 / np.sqrt(halfway_dim)
    W = jax.random.uniform(k_w, (output_dim, halfway_dim),
                           dtype=jnp.float32, minval=-bound, maxval=bound)

    out = selmul_forward(x, W, input_dim=input_dim, output_dim=output_dim)
    out = jax.block_until_ready(out)

    # Pure-numpy reference of the original torch semantics.
    x_np = np.asarray(x)
    W_np = np.asarray(W)
    outer = x_np[:, :, None] * x_np[:, None, :]                  # (B, D, D)
    mask = np.triu(np.ones((input_dim, input_dim), dtype=bool))  # flags
    sel = outer[:, mask]                                         # (B, halfway)
    ref = sel @ W_np.T                                           # (B, out)

    assert out.shape == (2, output_dim)
    np.testing.assert_allclose(np.asarray(out), ref, rtol=1e-5, atol=1e-5)

    # Also exercise the 1-D input path of the original module.
    out1d = selmul_forward(x[0], W, input_dim=input_dim, output_dim=output_dim)
    out1d = jax.block_until_ready(out1d)
    np.testing.assert_allclose(np.asarray(out1d), ref[0], rtol=1e-5, atol=1e-5)

    print("KERNEL_OK")
</pallas_src>

<mosaic_0001>
module attributes {stable_mosaic.version = 11 : i64} {
  func.func @_selmul_kernel(%arg0: i32, %arg1: memref<8x8xf32, #tpu.memory_space<vmem>>, %arg2: memref<64x128xf32, #tpu.memory_space<vmem>>, %arg3: memref<8x128xf32, #tpu.memory_space<vmem>>) attributes {dimension_semantics = [#tpu.dimension_semantics<parallel>], iteration_bounds = array<i64: 1>, scalar_prefetch = 0 : i64, scratch_operands = 0 : i64, tpu.core_type = #tpu.core_type<tc>, window_params = [{transform_indices = @transform_0, window_bounds = array<i64: 8, 8>}, {pipeline_mode = #tpu.pipeline_mode<synchronous>, transform_indices = @transform_1, window_bounds = array<i64: 64, 128>}, {transform_indices = @transform_2, window_bounds = array<i64: 8, 128>}]} {
    %c0 = arith.constant 0 : index
    %c0_0 = arith.constant 0 : index
    %0 = vector.load %arg1[%c0, %c0_0] : memref<8x8xf32, #tpu.memory_space<vmem>>, vector<8x8xf32>
    %1 = vector.extract_strided_slice %0 {offsets = [0, 0], sizes = [8, 1], strides = [1, 1]} : vector<8x8xf32> to vector<8x1xf32>
    %2 = vector.broadcast %1 : vector<8x1xf32> to vector<8x8xf32>
    %3 = arith.mulf %0, %2 : vector<8x8xf32>
    %4 = vector.extract_strided_slice %0 {offsets = [0, 1], sizes = [8, 1], strides = [1, 1]} : vector<8x8xf32> to vector<8x1xf32>
    %5 = vector.broadcast %4 : vector<8x1xf32> to vector<8x8xf32>
    %6 = arith.mulf %0, %5 : vector<8x8xf32>
    %7 = vector.extract_strided_slice %0 {offsets = [0, 2], sizes = [8, 1], strides = [1, 1]} : vector<8x8xf32> to vector<8x1xf32>
    %8 = vector.broadcast %7 : vector<8x1xf32> to vector<8x8xf32>
    %9 = arith.mulf %0, %8 : vector<8x8xf32>
    %10 = vector.extract_strided_slice %0 {offsets = [0, 3], sizes = [8, 1], strides = [1, 1]} : vector<8x8xf32> to vector<8x1xf32>
    %11 = vector.broadcast %10 : vector<8x1xf32> to vector<8x8xf32>
    %12 = arith.mulf %0, %11 : vector<8x8xf32>
    %13 = vector.extract_strided_slice %0 {offsets = [0, 4], sizes = [8, 1], strides = [1, 1]} : vector<8x8xf32> to vector<8x1xf32>
    %14 = vector.broadcast %13 : vector<8x1xf32> to vector<8x8xf32>
    %15 = arith.mulf %0, %14 : vector<8x8xf32>
    %16 = vector.extract_strided_slice %0 {offsets = [0, 5], sizes = [8, 1], strides = [1, 1]} : vector<8x8xf32> to vector<8x1xf32>
    %17 = vector.broadcast %16 : vector<8x1xf32> to vector<8x8xf32>
    %18 = arith.mulf %0, %17 : vector<8x8xf32>
    %19 = vector.extract_strided_slice %0 {offsets = [0, 6], sizes = [8, 1], strides = [1, 1]} : vector<8x8xf32> to vector<8x1xf32>
    %20 = vector.broadcast %19 : vector<8x1xf32> to vector<8x8xf32>
    %21 = arith.mulf %0, %20 : vector<8x8xf32>
    %22 = vector.extract_strided_slice %0 {offsets = [0, 7], sizes = [8, 1], strides = [1, 1]} : vector<8x8xf32> to vector<8x1xf32>
    %23 = vector.broadcast %22 : vector<8x1xf32> to vector<8x8xf32>
    %24 = arith.mulf %0, %23 : vector<8x8xf32>
    %25 = tpu.concatenate %3, %6, %9, %12, %15, %18, %21, %24 in 1 : vector<8x8xf32>, vector<8x8xf32>, vector<8x8xf32>, vector<8x8xf32>, vector<8x8xf32>, vector<8x8xf32>, vector<8x8xf32>, vector<8x8xf32> -> vector<8x64xf32>
    %c0_1 = arith.constant 0 : index
    %c0_2 = arith.constant 0 : index
    %26 = vector.load %arg2[%c0_1, %c0_2] : memref<64x128xf32, #tpu.memory_space<vmem>>, vector<64x128xf32>
    %cst = arith.constant dense<0.000000e+00> : vector<8x128xf32>
    %27 = tpu.matmul %25, %26, %cst {dimension_numbers = #tpu.dot_dimension_numbers<[1], [0], [0], [1], [0, 0, 1, 1], [], []>} : vector<8x64xf32>, vector<64x128xf32>, vector<8x128xf32> -> vector<8x128xf32>
    %c0_3 = arith.constant 0 : index
    %c0_4 = arith.constant 0 : index
    %28 = vector.load %arg3[%c0_3, %c0_4] : memref<8x128xf32, #tpu.memory_space<vmem>>, vector<8x128xf32>
    tpu.vector_store %arg3[%c0_3, %c0_4], %27 {strides = array<i32>} : memref<8x128xf32, #tpu.memory_space<vmem>>, vector<8x128xf32>,
    return
  }
  func.func @transform_0(%arg0: i32) -> (i32, i32) {
    %c0_i32 = arith.constant 0 : i32
    %c0_i32_0 = arith.constant 0 : i32
    return %arg0, %c0_i32 : i32, i32
  }
  func.func @transform_1(%arg0: i32) -> (i32, i32) {
    %c0_i32 = arith.constant 0 : i32
    %c0_i32_0 = arith.constant 0 : i32
    %c0_i32_1 = arith.constant 0 : i32
    return %c0_i32, %c0_i32_0 : i32, i32
  }
  func.func @transform_2(%arg0: i32) -> (i32, i32) {
    %c0_i32 = arith.constant 0 : i32
    %c0_i32_0 = arith.constant 0 : i32
    return %arg0, %c0_i32 : i32, i32
  }
}

</mosaic_0001>

<llo_original>
// kernel: tpu_custom_call.1
$region0: #{tpu_custom_call.1}
  #allocation0 [shape = 'u32[]', space=smem, size = 0x4, offset = 0x4, fixed_abs, tag = 'smem constant byte address 0x4 - core index']
  #allocation1 [shape = 'u32[144,128]{1,0:T(1,128)}', space=vmem, size = 0x12000, scoped, tag = 'internal scratch']
  %s0 = inlined_call_operand.hbm [shape: f32[8,8], index: 0, kind: input, shape index: {}]
  %s1 = inlined_call_operand.hbm [shape: f32[64,128], index: 1, kind: input, shape index: {}]
  %s2 = inlined_call_operand.hbm [shape: f32[8,128], index: 2, kind: output, shape index: {}]
  %s3 = sld [smem:[#allocation0]]
  $region26: #{tpu_custom_call.1} parent=0
    _
  %s5 = ssub.s32 1, %s3
  %s6 = scalar_select 0, %s5, %s3
  $region1: #{tpu_custom_call.1} parent=0
    #allocation2 [shape = 'u8[4096]{0}', space=vmem, size = 0x1000, scoped, tag = 'input window, operand 0, single buffered']
    #allocation3 [shape = 's32[1]{0}', space=sflag, size = 0x4, scoped, tag = 'scoped memory for tpu_custom_call.1']
    #allocation4 [shape = 's32[1]{0}', space=sflag, size = 0x4, scoped, tag = 'scoped memory for tpu_custom_call.1']
    #allocation5 [shape = 'u8[32768]{0}', space=vmem, size = 0x8000, scoped, tag = 'input window, operand 1, single buffered']
    #allocation6 [shape = 's32[1]{0}', space=sflag, size = 0x4, scoped, tag = 'scoped memory for tpu_custom_call.1']
    #allocation7 [shape = 'u8[4096]{0}', space=vmem, size = 0x1000, scoped, tag = 'output window, operand 0, single buffered']
    %7 = vsyncpa [#allocation3], 0
    %8 = vsyncpa [#allocation6], 0
    %9 = vsyncpa [#allocation4], 0
    // Predicated region
    $region2: #{tpu_custom_call.1} parent=1 // pred_check
      _
    $region3: #{tpu_custom_call.1} parent=1 // pred_check_branch
      %11 = sbr.rel (0) target = $region5
    $region4: #{tpu_custom_call.1} parent=1 // pred_region
      %s13 = ssub.s32 128, 128
      %14 = vsyncadd [#allocation3], %s13
      %s16 = sshll.u32 [#allocation2], 4
      %s17 = int_to_ptr.vmem [resolvable:$true] %s16
      %19 = dma.hbm_to_vmem [thread:$0]  %s0, 128, %s17, [#allocation3]
    $region5: #{tpu_custom_call.1} parent=1 // pred_fallthru
      _
    // Predicated region
    $region6: #{tpu_custom_call.1} parent=1 // pred_check
      _
    $region7: #{tpu_custom_call.1} parent=1 // pred_check_branch
      %21 = sbr.rel (0) target = $region9
    $region8: #{tpu_custom_call.1} parent=1 // pred_region
      %s23 = ssub.s32 1024, 1024
      %24 = vsyncadd [#allocation6], %s23
      %s25 = sshll.u32 [#allocation5], 4
      %s26 = int_to_ptr.vmem [resolvable:$true] %s25
      %31 = dma.hbm_to_vmem [thread:$0]  %s1, 1024, %s26, [#allocation6], 128, 128, 8
    $region9: #{tpu_custom_call.1} parent=1 // pred_fallthru
      _
    // Predicated region
    $region10: #{tpu_custom_call.1} parent=1 // pred_check
      _
    $region11: #{tpu_custom_call.1} parent=1 // pred_check_branch
      %33 = sbr.rel (0) target = $region13
    $region12: #{tpu_custom_call.1} parent=1 // pred_region
      %34 = dma.done [#allocation3], 128
    $region13: #{tpu_custom_call.1} parent=1 // pred_fallthru
      _
    // Predicated region
    $region14: #{tpu_custom_call.1} parent=1 // pred_check
      _
    $region15: #{tpu_custom_call.1} parent=1 // pred_check_branch
      %36 = sbr.rel (0) target = $region17
    $region16: #{tpu_custom_call.1} parent=1 // pred_region
      %37 = dma.done [#allocation6], 1024
    $region17: #{tpu_custom_call.1} parent=1 // pred_fallthru
      _
    %v38 = vld [vmem:[#allocation2] sm:$0xff]
    %40 = vset.pattern.permute.xlu0 0
    %41 = vperm.xlu0 %40, %v38
    %v42 = vpop.permute.xlu0 %41
    %v44 = vmul.f32 %v38, %v42
    %45 = vset.pattern.permute.xlu0 1
    %46 = vperm.xlu0 %45, %v38
    %v47 = vpop.permute.xlu0 %46
    %v49 = vmul.f32 %v38, %v47
    %50 = vset.pattern.permute.xlu0 2
    %51 = vperm.xlu0 %50, %v38
    %v52 = vpop.permute.xlu0 %51
    %v54 = vmul.f32 %v38, %v52
    %55 = vset.pattern.permute.xlu0 3
    %56 = vperm.xlu0 %55, %v38
    %v57 = vpop.permute.xlu0 %56
    %v59 = vmul.f32 %v38, %v57
    %60 = vset.pattern.permute.xlu0 4
    %61 = vperm.xlu0 %60, %v38
    %v62 = vpop.permute.xlu0 %61
    %v64 = vmul.f32 %v38, %v62
    %65 = vset.pattern.permute.xlu0 5
    %66 = vperm.xlu0 %65, %v38
    %v67 = vpop.permute.xlu0 %66
    %v69 = vmul.f32 %v38, %v67
    %70 = vset.pattern.permute.xlu0 6
    %71 = vperm.xlu0 %70, %v38
    %v72 = vpop.permute.xlu0 %71
    %v74 = vmul.f32 %v38, %v72
    %75 = vset.pattern.permute.xlu0 7
    %76 = vperm.xlu0 %75, %v38
    %v77 = vpop.permute.xlu0 %76
    %v79 = vmul.f32 %v38, %v77
    %81 = vrot.lane.b32.xlu0 %v49, 8
    %v82 = vpop.permute.xlu0 %81
    %85 = vrot.lane.b32.xlu0 %v54, 16
    %v86 = vpop.permute.xlu0 %85
    %89 = vrot.lane.b32.xlu0 %v59, 24
    %v90 = vpop.permute.xlu0 %89
    %93 = vrot.lane.b32.xlu0 %v64, 32
    %v94 = vpop.permute.xlu0 %93
    %97 = vrot.lane.b32.xlu0 %v69, 40
    %v98 = vpop.permute.xlu0 %97
    %101 = vrot.lane.b32.xlu0 %v74, 48
    %v102 = vpop.permute.xlu0 %101
    %105 = vrot.lane.b32.xlu0 %v79, 56
    %v106 = vpop.permute.xlu0 %105
    %vm108 = vcmask 64512
    %v109 = vsel %vm108, %v44, %v82
    %vm110 = vcmask 130048
    %v111 = vsel %vm110, %v109, %v86
    %vm112 = vcmask 195584
    %v113 = vsel %vm112, %v111, %v90
    %vm114 = vcmask 261120
    %v115 = vsel %vm114, %v113, %v94
    %vm116 = vcmask 326656
    %v117 = vsel %vm116, %v115, %v98
    %vm118 = vcmask 392192
    %v119 = vsel %vm118, %v117, %v102
    %vm120 = vcmask 457728
    %v121 = vsel %vm120, %v119, %v106
    %v122 = vld [vmem:[#allocation5] sm:$0xff]
    %v123 = vld [vmem:[#allocation5 + $0x8] sm:$0xff]
    %v124 = vld [vmem:[#allocation5 + $0x10] sm:$0xff]
    %v125 = vld [vmem:[#allocation5 + $0x18] sm:$0xff]
    %v126 = vld [vmem:[#allocation5 + $0x20] sm:$0xff]
    %v127 = vld [vmem:[#allocation5 + $0x28] sm:$0xff]
    %v128 = vld [vmem:[#allocation5 + $0x30] sm:$0xff]
    %v129 = vld [vmem:[#allocation5 + $0x38] sm:$0xff]
    %vm130 = vcmask 523264
    %v132 = vsel %vm130, %v121, 0
    %134 = vmatprep.subr.mxu0 0.0
    %135 = vmatpush1.msra.mxu0 0.0
    %136 = vmatprep.subr.mxu0 0.0
    %137 = vmatpush1.msra.mxu0 0.0
    %138 = vmatprep.subr.mxu0 0.0
    %139 = vmatpush1.msra.mxu0 0.0
    %140 = vmatprep.subr.mxu0 0.0
    %141 = vmatpush1.msra.mxu0 0.0
    %142 = vmatprep.subr.mxu0 0.0
    %143 = vmatpush1.msra.mxu0 0.0
    %144 = vmatprep.subr.mxu0 0.0
    %145 = vmatpush1.msra.mxu0 0.0
    %146 = vmatprep.subr.mxu0 0.0
    %147 = vmatpush1.msra.mxu0 0.0
    %148 = vmatprep.subr.mxu0 0.0
    %149 = vmatpush1.msra.mxu0 0.0
    %150 = vmatprep.subr.mxu0 0.0
    %151 = vmatpush1.msra.mxu0 %v129
    %152 = vmatprep.subr.mxu0 0.0
    %153 = vmatpush1.msra.mxu0 %v128
    %154 = vmatprep.subr.mxu0 0.0
    %155 = vmatpush1.msra.mxu0 %v127
    %156 = vmatprep.subr.mxu0 0.0
    %157 = vmatpush1.msra.mxu0 %v126
    %158 = vmatprep.subr.mxu0 0.0
    %159 = vmatpush1.msra.mxu0 %v125
    %160 = vmatprep.subr.mxu0 0.0
    %161 = vmatpush1.msra.mxu0 %v124
    %162 = vmatprep.subr.mxu0 0.0
    %163 = vmatpush1.msra.mxu0 %v123
    %164 = vmatprep.subr.mxu0 0.0
    %165 = vmatpush1.msra.mxu0 %v122
    %166 = vmatprep.subr.mxu0 0.0
    %167 = vmatpush2.msra.mxu0 0.0
    %168 = vmatprep.subr.mxu0 0.0
    %169 = vmatpush2.msra.mxu0 0.0
    %170 = vmatprep.subr.mxu0 0.0
    %171 = vmatpush2.msra.mxu0 0.0
    %172 = vmatprep.subr.mxu0 0.0
    %173 = vmatpush2.msra.mxu0 0.0
    %174 = vmatprep.subr.mxu0 0.0
    %175 = vmatpush2.msra.mxu0 0.0
    %176 = vmatprep.subr.mxu0 0.0
    %177 = vmatpush2.msra.mxu0 0.0
    %178 = vmatprep.subr.mxu0 0.0
    %179 = vmatpush2.msra.mxu0 0.0
    %180 = vmatprep.subr.mxu0 0.0
    %181 = vmatpush2.msra.mxu0 0.0
    %182 = vmatprep.subr.mxu0 0.0
    %183 = vmatpush2.msra.mxu0 0.0
    %184 = vmatprep.subr.mxu0 0.0
    %185 = vmatpush2.msra.mxu0 0.0
    %186 = vmatprep.subr.mxu0 0.0
    %187 = vmatpush2.msra.mxu0 0.0
    %188 = vmatprep.subr.mxu0 0.0
    %189 = vmatpush2.msra.mxu0 0.0
    %190 = vmatprep.subr.mxu0 0.0
    %191 = vmatpush2.msra.mxu0 0.0
    %192 = vmatprep.subr.mxu0 0.0
    %193 = vmatpush2.msra.mxu0 0.0
    %194 = vmatprep.subr.mxu0 0.0
    %195 = vmatpush2.msra.mxu0 0.0
    %196 = vmatprep.subr.mxu0 0.0
    %197 = vmatpush2.msra.mxu0 0.0
    %198 = vmatprep.mubr.f32.mxu0 0.0
    %199 = vmatmul.mubr.f32.gmra.mxu0 %v132
    %v200 = vpop.f32.mrf.mxu0
    %v201 = vadd.f32 0.0, %v200
    %v202 = vpop.f32.mrf.mxu0
    %203 = vdwg.mxu0
    %204 = vst [vmem:[#allocation7] sm:$0xff] %v201
    // Predicated region
    $region18: #{tpu_custom_call.1} parent=1 // pred_check
      _
    $region19: #{tpu_custom_call.1} parent=1 // pred_check_branch
      %206 = sbr.rel (0) target = $region21
    $region20: #{tpu_custom_call.1} parent=1 // pred_region
      %s208 = ssub.s32 128, 128
      %209 = vsyncadd [#allocation4], %s208
      %s211 = sshll.u32 [#allocation7], 4
      %s212 = int_to_ptr.vmem [resolvable:$true] %s211
      %214 = dma.vmem_to_hbm [thread:$0]  %s212, 128, %s2, [#allocation4]
    $region21: #{tpu_custom_call.1} parent=1 // pred_fallthru
      _
    // Predicated region
    $region22: #{tpu_custom_call.1} parent=1 // pred_check
      _
    $region23: #{tpu_custom_call.1} parent=1 // pred_check_branch
      %216 = sbr.rel (0) target = $region25
    $region24: #{tpu_custom_call.1} parent=1 // pred_region
      %217 = dma.done [#allocation4], 128
    $region25: #{tpu_custom_call.1} parent=1 // pred_fallthru
      _
    %218 = vsyncpa [#allocation3], 1
    %219 = vsyncpa [#allocation6], 1
    %220 = vsyncpa [#allocation4], 1

</llo_original>
